<compile_context>
chip_gen: v6e
topology: v6e:2x2x1
jax: 0.10.0
libtpu: 0.0.40
codegen_flags: <defaults>
</compile_context>

<pallas_src>
import math

import jax
import jax.numpy as jnp
from jax.experimental import pallas as pl
from jax.experimental.pallas import tpu as pltpu

RADIUS = 3.5


def _round_up(x, m):
    return ((x + m - 1) // m) * m


# ----------------------------------------------------------------------------
# Kernel A: surface encoder + GCN feature transform (surface rows only, bf16)
# ----------------------------------------------------------------------------
def surf_encoder_kernel(pos_ref, sw_ref, sb_ref, gcnw_ref, o_ref):
    h = jnp.dot(pos_ref[...], sw_ref[...],
                preferred_element_type=jnp.float32) + sb_ref[...]
    o_ref[...] = jnp.dot(h, gcnw_ref[...],
                         preferred_element_type=jnp.float32).astype(o_ref.dtype)


# ----------------------------------------------------------------------------
# Kernel B: time MLP + ConcatSquashLinear + GCN transform (ligand rows only)
# ----------------------------------------------------------------------------
def lig_encoder_kernel(pos_ref, emb_ref, t1w_ref, t1b_ref, t2w_ref, t2b_ref,
                       lw_ref, lb_ref, gw_ref, gb_ref, bw_ref, gcnw_ref, o_ref):
    # time_emb: Linear -> GELU (exact, nn.GELU default) -> Linear
    ht = jnp.dot(emb_ref[...], t1w_ref[...],
                 preferred_element_type=jnp.float32) + t1b_ref[...]
    ht = jax.nn.gelu(ht, approximate=False)
    ht = jnp.dot(ht, t2w_ref[...], preferred_element_type=jnp.float32) + t2b_ref[...]

    # ligand_pos_encoder: ConcatSquashLinear
    lin = jnp.dot(pos_ref[...], lw_ref[...],
                  preferred_element_type=jnp.float32) + lb_ref[...]
    gate = jax.nn.sigmoid(
        jnp.dot(ht, gw_ref[...], preferred_element_type=jnp.float32) + gb_ref[...])
    hyper_bias = jnp.dot(ht, bw_ref[...], preferred_element_type=jnp.float32)
    h = lin * gate + hyper_bias

    # GCN feature transform (self-loop term); kept f32, it is only vector-added.
    o_ref[...] = jnp.dot(h, gcnw_ref[...], preferred_element_type=jnp.float32)


# ----------------------------------------------------------------------------
# Kernel C: radius graph (ligand dst x surface src) + GCN + position_mlp
# grid = (ligand row tiles [parallel], surface column tiles [arbitrary])
# ----------------------------------------------------------------------------
def gcn_pos_kernel(posl_ref, possT_ref, batl_ref, batsT_ref,
                   xws_ref, xwl_ref, gcnb_ref, posw_ref, posb_ref,
                   o_ref, acc_ref, deg_ref):
    k = pl.program_id(1)

    @pl.when(k == 0)
    def _():
        acc_ref[...] = jnp.zeros_like(acc_ref)
        deg_ref[...] = jnp.zeros_like(deg_ref)

    posl = posl_ref[...]          # (TM, 3)  ligand (dst) positions
    possT = possT_ref[...]        # (3, TK)  surface (src) positions, pre-transposed

    # exact pairwise squared distances via coordinate differences (VPU only)
    d2 = jnp.zeros((posl.shape[0], possT.shape[1]), jnp.float32)
    for c in range(3):            # static, tiny
        diff = posl[:, c:c + 1] - possT[c:c + 1, :]
        d2 = d2 + diff * diff

    # edge src(surface) -> dst(ligand) kept iff within radius and same graph.
    # Surface/ligand masks are structural now (rows are ligand, cols surface);
    # padded rows/cols carry batch id -1 and are excluded by the batch check.
    # TODO(synk): edges at exactly d == 3.5 A are included (<=); verify the
    # boundary convention against torch_cluster.radius_graph.
    adj = ((d2 <= RADIUS * RADIUS)
           & (batl_ref[...] == batsT_ref[...])).astype(jnp.float32)

    deg_ref[...] += jnp.sum(adj, axis=1, keepdims=True)
    # bf16 adjacency (0/1 exact) x bf16 XW_surf -> f32 accumulate: full-rate MXU
    acc_ref[...] += jnp.dot(adj.astype(jnp.bfloat16), xws_ref[...],
                            preferred_element_type=jnp.float32)

    @pl.when(k == pl.num_programs(1) - 1)
    def _():
        # PyG gcn_norm with self-loops; surface sources have dinv == 1, so:
        #   out_i = dinv_i * ((A @ XW_surf)_i + dinv_i * XW_lig_i) + b
        dinv = jax.lax.rsqrt(deg_ref[...] + 1.0)
        h_out = dinv * (acc_ref[...] + dinv * xwl_ref[...]) + gcnb_ref[...]
        # fused position_mlp epilogue (lane-dense padded output)
        o_ref[...] = (jnp.dot(h_out, posw_ref[...], preferred_element_type=jnp.float32)
                      + posb_ref[...])


# ----------------------------------------------------------------------------
# Plain-JAX glue
# ----------------------------------------------------------------------------
def sinusoidal_pos_emb(x, dim):
    half = dim // 2
    scale = math.log(10000.0) / (half - 1)
    freqs = jnp.exp(jnp.arange(half, dtype=jnp.float32) * -scale)
    args = x[:, None] * freqs[None, :]
    return jnp.concatenate([jnp.sin(args), jnp.cos(args)], axis=-1)


def init_params(key, hidden_dim, time_emb_dim, num_layers):
    def lin(k, din, dout, bias=True, scale=0.1):
        kw, kb = jax.random.split(k)
        w = scale * jax.random.normal(kw, (din, dout), jnp.float32)
        b = scale * jax.random.normal(kb, (1, dout), jnp.float32) if bias else None
        return w, b

    keys = jax.random.split(key, 7 + num_layers)
    p = {}
    p["surf_w"], p["surf_b"] = lin(keys[0], 3, hidden_dim)
    p["t1_w"], p["t1_b"] = lin(keys[1], time_emb_dim, time_emb_dim * 4)
    p["t2_w"], p["t2_b"] = lin(keys[2], time_emb_dim * 4, time_emb_dim)
    p["cs_l_w"], p["cs_l_b"] = lin(keys[3], 3, hidden_dim)
    p["cs_g_w"], p["cs_g_b"] = lin(keys[4], time_emb_dim, hidden_dim)
    p["cs_b_w"], _ = lin(keys[5], time_emb_dim, hidden_dim, bias=False)
    p["pos_w"], p["pos_b"] = lin(keys[6], hidden_dim, 3)
    p["gcn"] = [lin(keys[7 + i], hidden_dim, hidden_dim) for i in range(num_layers)]
    return p


def gnn_forward(params, surface_pos, init_ligand_pos, batch_surface, batch_ligand, time,
                hidden_dim, time_emb_dim):
    f32 = jnp.float32
    bf16 = jnp.bfloat16
    te = time_emb_dim
    n_s = surface_pos.shape[0]
    n_l = init_ligand_pos.shape[0]

    HP = _round_up(max(hidden_dim, 128), 128)       # lane-dense hidden width
    OP = 128                                        # lane-dense padded position output
    TM = min(_round_up(n_l, 8), 256)                # ligand dst-row tile (256 -> full MXU on v6e/v7x)
    TK = min(_round_up(n_s, 128), 512)              # surface src-column (K) tile
    n_l_pad = _round_up(n_l, TM)
    n_s_pad = _round_up(n_s, TK)

    # ---- surface side (sources): pad + pre-transposed column views ----
    pos_s = jnp.concatenate([surface_pos, jnp.zeros((n_s_pad - n_s, 3), f32)], axis=0)
    bat_s = jnp.concatenate([batch_surface.astype(jnp.int32),
                             -jnp.ones((n_s_pad - n_s,), jnp.int32)], axis=0)
    pos_sT = pos_s.T                                # (3, n_s_pad)
    bat_sT = bat_s[None, :]                         # (1, n_s_pad)

    # ---- ligand side (destinations): pad ----
    pos_l = jnp.concatenate([init_ligand_pos, jnp.zeros((n_l_pad - n_l, 3), f32)], axis=0)
    bat_l = jnp.concatenate([batch_ligand.astype(jnp.int32),
                             -jnp.ones((n_l_pad - n_l,), jnp.int32)], axis=0)[:, None]

    # sinusoidal time embedding (ligand rows only)
    emb = sinusoidal_pos_emb(jnp.squeeze(time, -1), te).astype(f32)
    emb = jnp.concatenate([emb, jnp.zeros((n_l_pad - n_l, te), f32)], axis=0)

    # ---- zero-pad parameters to lane-dense widths ----
    def pad2(a, r, c):
        return jnp.pad(a, ((0, r - a.shape[0]), (0, c - a.shape[1])))

    sw = pad2(params["surf_w"], 3, HP);            sb = pad2(params["surf_b"], 1, HP)
    lw = pad2(params["cs_l_w"], 3, HP);            lb = pad2(params["cs_l_b"], 1, HP)
    gw = pad2(params["cs_g_w"], te, HP);           gb = pad2(params["cs_g_b"], 1, HP)
    bw = pad2(params["cs_b_w"], te, HP)
    gcn_w, gcn_b = params["gcn"][-1]   # only the last layer's output survives the loop
    gcn_w = pad2(gcn_w, HP, HP)
    gcn_b = pad2(gcn_b, 1, HP)
    pw = pad2(params["pos_w"], HP, OP)
    pb = pad2(params["pos_b"], 1, OP)
    t1w, t1b = params["t1_w"], params["t1_b"]
    t2w, t2b = params["t2_w"], params["t2_b"]

    # ---- kernel A: surface encoder + X @ W_gcn (row-tiled, bf16 output) ----
    xw_surf = pl.pallas_call(
        surf_encoder_kernel,
        out_shape=jax.ShapeDtypeStruct((n_s_pad, HP), bf16),
        grid_spec=pltpu.PrefetchScalarGridSpec(
            num_scalar_prefetch=0,
            grid=(n_s_pad // TK,),
            in_specs=[
                pl.BlockSpec((TK, 3), lambda i: (i, 0)),
                pl.BlockSpec((3, HP), lambda i: (0, 0)),
                pl.BlockSpec((1, HP), lambda i: (0, 0)),
                pl.BlockSpec((HP, HP), lambda i: (0, 0)),
            ],
            out_specs=pl.BlockSpec((TK, HP), lambda i: (i, 0)),
        ),
        compiler_params=pltpu.CompilerParams(dimension_semantics=("parallel",)),
    )(pos_s, sw, sb, gcn_w)

    # ---- kernel B: ligand time MLP + ConcatSquash + X @ W_gcn (row-tiled) ----
    xw_lig = pl.pallas_call(
        lig_encoder_kernel,
        out_shape=jax.ShapeDtypeStruct((n_l_pad, HP), f32),
        grid_spec=pltpu.PrefetchScalarGridSpec(
            num_scalar_prefetch=0,
            grid=(n_l_pad // TM,),
            in_specs=[
                pl.BlockSpec((TM, 3), lambda i: (i, 0)),
                pl.BlockSpec((TM, te), lambda i: (i, 0)),
                pl.BlockSpec((te, 4 * te), lambda i: (0, 0)),
                pl.BlockSpec((1, 4 * te), lambda i: (0, 0)),
                pl.BlockSpec((4 * te, te), lambda i: (0, 0)),
                pl.BlockSpec((1, te), lambda i: (0, 0)),
                pl.BlockSpec((3, HP), lambda i: (0, 0)),
                pl.BlockSpec((1, HP), lambda i: (0, 0)),
                pl.BlockSpec((te, HP), lambda i: (0, 0)),
                pl.BlockSpec((1, HP), lambda i: (0, 0)),
                pl.BlockSpec((te, HP), lambda i: (0, 0)),
                pl.BlockSpec((HP, HP), lambda i: (0, 0)),
            ],
            out_specs=pl.BlockSpec((TM, HP), lambda i: (i, 0)),
        ),
        compiler_params=pltpu.CompilerParams(dimension_semantics=("parallel",)),
    )(pos_l, emb, t1w, t1b, t2w, t2b, lw, lb, gw, gb, bw, gcn_w)

    # ---- kernel C: K-tiled radius graph + GCN aggregation + position_mlp ----
    grid_spec = pltpu.PrefetchScalarGridSpec(
        num_scalar_prefetch=0,
        grid=(n_l_pad // TM, n_s_pad // TK),
        in_specs=[
            pl.BlockSpec((TM, 3), lambda i, k: (i, 0)),     # ligand dst positions
            pl.BlockSpec((3, TK), lambda i, k: (0, k)),     # surface src positions (T)
            pl.BlockSpec((TM, 1), lambda i, k: (i, 0)),     # ligand dst batch id
            pl.BlockSpec((1, TK), lambda i, k: (0, k)),     # surface src batch id (T)
            pl.BlockSpec((TK, HP), lambda i, k: (k, 0)),    # XW_surf K-tile (bf16)
            pl.BlockSpec((TM, HP), lambda i, k: (i, 0)),    # XW_lig row tile (self-loop)
            pl.BlockSpec((1, HP), lambda i, k: (0, 0)),     # GCN bias
            pl.BlockSpec((HP, OP), lambda i, k: (0, 0)),    # position_mlp weight
            pl.BlockSpec((1, OP), lambda i, k: (0, 0)),     # position_mlp bias
        ],
        out_specs=pl.BlockSpec((TM, OP), lambda i, k: (i, 0)),
        scratch_shapes=[pltpu.VMEM((TM, HP), jnp.float32),   # agg accumulator
                        pltpu.VMEM((TM, 1), jnp.float32)],   # degree accumulator
    )
    pred_pad = pl.pallas_call(
        gcn_pos_kernel,
        out_shape=jax.ShapeDtypeStruct((n_l_pad, OP), f32),
        grid_spec=grid_spec,
        compiler_params=pltpu.CompilerParams(
            # row tiles independent (megacore), K axis is a reduction
            dimension_semantics=("parallel", "arbitrary"),
        ),
    )(pos_l, pos_sT, bat_l, bat_sT, xw_surf, xw_lig, gcn_b, pw, pb)

    # ligand rows, first 3 lanes
    return pred_pad[:n_l, :3]


if __name__ == "__main__":
    hidden_dim, time_emb_dim, num_layers = 32, 16, 2
    n_surf, n_lig = 16, 8

    key = jax.random.PRNGKey(0)
    k1, k2, k3, kp = jax.random.split(key, 4)
    surface_pos = 2.0 * jax.random.normal(k1, (n_surf, 3), jnp.float32)
    init_ligand_pos = 2.0 * jax.random.normal(k2, (n_lig, 3), jnp.float32)
    batch_surface = jnp.zeros((n_surf,), jnp.int32)
    batch_ligand = jnp.zeros((n_lig,), jnp.int32)
    time = jax.random.uniform(k3, (n_lig, 1), jnp.float32) * 1000.0

    params = init_params(kp, hidden_dim, time_emb_dim, num_layers)

    out = gnn_forward(params, surface_pos, init_ligand_pos, batch_surface, batch_ligand,
                      time, hidden_dim, time_emb_dim)
    jax.block_until_ready(out)
    assert out.shape == (n_lig, 3) and out.dtype == jnp.float32
    print("KERNEL_OK")
</pallas_src>

<mosaic_0001>
module attributes {stable_mosaic.version = 11 : i64} {
  func.func @surf_encoder_kernel(%arg0: i32, %arg1: memref<128x3xf32, #tpu.memory_space<vmem>>, %arg2: memref<3x128xf32, #tpu.memory_space<vmem>>, %arg3: memref<1x128xf32, #tpu.memory_space<vmem>>, %arg4: memref<128x128xf32, #tpu.memory_space<vmem>>, %arg5: memref<128x128xbf16, #tpu.memory_space<vmem>>) attributes {dimension_semantics = [#tpu.dimension_semantics<parallel>], iteration_bounds = array<i64: 1>, scalar_prefetch = 0 : i64, scratch_operands = 0 : i64, tpu.core_type = #tpu.core_type<tc>, window_params = [{transform_indices = @transform_0, window_bounds = array<i64: 128, 3>}, {pipeline_mode = #tpu.pipeline_mode<synchronous>, transform_indices = @transform_1, window_bounds = array<i64: 3, 128>}, {pipeline_mode = #tpu.pipeline_mode<synchronous>, transform_indices = @transform_2, window_bounds = array<i64: 1, 128>}, {pipeline_mode = #tpu.pipeline_mode<synchronous>, transform_indices = @transform_3, window_bounds = array<i64: 128, 128>}, {transform_indices = @transform_4, window_bounds = array<i64: 128, 128>}]} {
    %c0 = arith.constant 0 : index
    %c0_0 = arith.constant 0 : index
    %0 = vector.load %arg1[%c0, %c0_0] : memref<128x3xf32, #tpu.memory_space<vmem>>, vector<128x3xf32>
    %c0_1 = arith.constant 0 : index
    %c0_2 = arith.constant 0 : index
    %1 = vector.load %arg2[%c0_1, %c0_2] : memref<3x128xf32, #tpu.memory_space<vmem>>, vector<3x128xf32>
    %cst = arith.constant dense<0.000000e+00> : vector<128x128xf32>
    %2 = tpu.matmul %0, %1, %cst {dimension_numbers = #tpu.dot_dimension_numbers<[1], [0], [0], [1], [0, 0, 1, 1], [], []>} : vector<128x3xf32>, vector<3x128xf32>, vector<128x128xf32> -> vector<128x128xf32>
    %c0_3 = arith.constant 0 : index
    %c0_4 = arith.constant 0 : index
    %3 = vector.load %arg3[%c0_3, %c0_4] : memref<1x128xf32, #tpu.memory_space<vmem>>, vector<1x128xf32>
    %4 = vector.broadcast %3 : vector<1x128xf32> to vector<128x128xf32>
    %5 = arith.addf %2, %4 : vector<128x128xf32>
    %c0_5 = arith.constant 0 : index
    %c0_6 = arith.constant 0 : index
    %6 = vector.load %arg4[%c0_5, %c0_6] : memref<128x128xf32, #tpu.memory_space<vmem>>, vector<128x128xf32>
    %cst_7 = arith.constant dense<0.000000e+00> : vector<128x128xf32>
    %7 = tpu.matmul %5, %6, %cst_7 {dimension_numbers = #tpu.dot_dimension_numbers<[1], [0], [0], [1], [0, 0, 1, 1], [], []>} : vector<128x128xf32>, vector<128x128xf32>, vector<128x128xf32> -> vector<128x128xf32>
    %8 = arith.truncf %7 : vector<128x128xf32> to vector<128x128xbf16>
    %c0_8 = arith.constant 0 : index
    %c0_9 = arith.constant 0 : index
    %9 = vector.load %arg5[%c0_8, %c0_9] : memref<128x128xbf16, #tpu.memory_space<vmem>>, vector<128x128xbf16>
    tpu.vector_store %arg5[%c0_8, %c0_9], %8 {strides = array<i32>} : memref<128x128xbf16, #tpu.memory_space<vmem>>, vector<128x128xbf16>,
    return
  }
  func.func @transform_0(%arg0: i32) -> (i32, i32) {
    %c0_i32 = arith.constant 0 : i32
    %c0_i32_0 = arith.constant 0 : i32
    return %arg0, %c0_i32 : i32, i32
  }
  func.func @transform_1(%arg0: i32) -> (i32, i32) {
    %c0_i32 = arith.constant 0 : i32
    %c0_i32_0 = arith.constant 0 : i32
    %c0_i32_1 = arith.constant 0 : i32
    return %c0_i32, %c0_i32_0 : i32, i32
  }
  func.func @transform_2(%arg0: i32) -> (i32, i32) {
    %c0_i32 = arith.constant 0 : i32
    %c0_i32_0 = arith.constant 0 : i32
    %c0_i32_1 = arith.constant 0 : i32
    return %c0_i32, %c0_i32_0 : i32, i32
  }
  func.func @transform_3(%arg0: i32) -> (i32, i32) {
    %c0_i32 = arith.constant 0 : i32
    %c0_i32_0 = arith.constant 0 : i32
    %c0_i32_1 = arith.constant 0 : i32
    return %c0_i32, %c0_i32_0 : i32, i32
  }
  func.func @transform_4(%arg0: i32) -> (i32, i32) {
    %c0_i32 = arith.constant 0 : i32
    %c0_i32_0 = arith.constant 0 : i32
    return %arg0, %c0_i32 : i32, i32
  }
}

</mosaic_0001>

<llo_original>
// kernel: tpu_custom_call.1
$region0: #{tpu_custom_call.1}
  #allocation0 [shape = 'u32[]', space=smem, size = 0x4, offset = 0x4, fixed_abs, tag = 'smem constant byte address 0x4 - core index']
  #allocation1 [shape = 'u32[144,128]{1,0:T(1,128)}', space=vmem, size = 0x12000, scoped, tag = 'internal scratch']
  %s0 = inlined_call_operand.vmem [shape: f32[128,3], index: 0, kind: input, shape index: {}]
  %s1 = inlined_call_operand.vmem [shape: f32[3,128], index: 1, kind: input, shape index: {}]
  %s2 = inlined_call_operand.vmem [shape: f32[1,128], index: 2, kind: input, shape index: {}]
  %s3 = inlined_call_operand.vmem [shape: f32[128,128], index: 3, kind: input, shape index: {}]
  %s4 = inlined_call_operand.hbm [shape: bf16[128,128], index: 4, kind: output, shape index: {}]
  %s5 = sld [smem:[#allocation0]]
  $region26: #{tpu_custom_call.1} parent=0
    _
  %s7 = ssub.s32 1, %s5
  %s8 = scalar_select 0, %s7, %s5
  $region1: #{tpu_custom_call.1} parent=0
    #allocation2 [shape = 'u8[32768]{0}', space=vmem, size = 0x8000, scoped, tag = 'output window, operand 0, single buffered']
    #allocation3 [shape = 's32[1]{0}', space=sflag, size = 0x4, scoped, tag = 'scoped memory for tpu_custom_call.1']
    %9 = vsyncpa [#allocation3], 0
    // Predicated region
    $region2: #{tpu_custom_call.1} parent=1 // pred_check
      _
    $region3: #{tpu_custom_call.1} parent=1 // pred_check_branch
      %11 = sbr.rel (0) target = $region5
    $region4: #{tpu_custom_call.1} parent=1 // pred_region
      _
    $region5: #{tpu_custom_call.1} parent=1 // pred_fallthru
      _
    // Predicated region
    $region6: #{tpu_custom_call.1} parent=1 // pred_check
      _
    $region7: #{tpu_custom_call.1} parent=1 // pred_check_branch
      %13 = sbr.rel (0) target = $region9
    $region8: #{tpu_custom_call.1} parent=1 // pred_region
      _
    $region9: #{tpu_custom_call.1} parent=1 // pred_fallthru
      _
    // Predicated region
    $region10: #{tpu_custom_call.1} parent=1 // pred_check
      _
    $region11: #{tpu_custom_call.1} parent=1 // pred_check_branch
      %15 = sbr.rel (0) target = $region13
    $region12: #{tpu_custom_call.1} parent=1 // pred_region
      _
    $region13: #{tpu_custom_call.1} parent=1 // pred_fallthru
      _
    // Predicated region
    $region14: #{tpu_custom_call.1} parent=1 // pred_check
      _
    $region15: #{tpu_custom_call.1} parent=1 // pred_check_branch
      %17 = sbr.rel (0) target = $region17
    $region16: #{tpu_custom_call.1} parent=1 // pred_region
      _
    $region17: #{tpu_custom_call.1} parent=1 // pred_fallthru
      _
    %v18 = vld [vmem:[%s0] sm:$0xff]
    %v19 = vld [vmem:[%s0 + $0x8] sm:$0xff]
    %v20 = vld [vmem:[%s0 + $0x10] sm:$0xff]
    %v21 = vld [vmem:[%s0 + $0x18] sm:$0xff]
    %v22 = vld [vmem:[%s0 + $0x20] sm:$0xff]
    %v23 = vld [vmem:[%s0 + $0x28] sm:$0xff]
    %v24 = vld [vmem:[%s0 + $0x30] sm:$0xff]
    %v25 = vld [vmem:[%s0 + $0x38] sm:$0xff]
    %v26 = vld [vmem:[%s0 + $0x40] sm:$0xff]
    %v27 = vld [vmem:[%s0 + $0x48] sm:$0xff]
    %v28 = vld [vmem:[%s0 + $0x50] sm:$0xff]
    %v29 = vld [vmem:[%s0 + $0x58] sm:$0xff]
    %v30 = vld [vmem:[%s0 + $0x60] sm:$0xff]
    %v31 = vld [vmem:[%s0 + $0x68] sm:$0xff]
    %v32 = vld [vmem:[%s0 + $0x70] sm:$0xff]
    %v33 = vld [vmem:[%s0 + $0x78] sm:$0xff]
    %v34 = vld [vmem:[%s1] sm:$0x7]
    %v35 = vld [vmem:[%s2] sm:$0x1]
    %v37 = vlaneseq
    %v38 = vshrl.u32 %v37, 7
    %v39 = vsub.s32 0, %v38
    %v40 = vrot.slane %v35, %v39
    %vm42 = vcmask 23552
    %v44 = vsel %vm42, %v18, 0
    %v47 = vsel %vm42, %v19, 0
    %v50 = vsel %vm42, %v20, 0
    %v53 = vsel %vm42, %v21, 0
    %v56 = vsel %vm42, %v22, 0
    %v59 = vsel %vm42, %v23, 0
    %v62 = vsel %vm42, %v24, 0
    %v65 = vsel %vm42, %v25, 0
    %v68 = vsel %vm42, %v26, 0
    %v71 = vsel %vm42, %v27, 0
    %v74 = vsel %vm42, %v28, 0
    %v77 = vsel %vm42, %v29, 0
    %v80 = vsel %vm42, %v30, 0
    %v83 = vsel %vm42, %v31, 0
    %v86 = vsel %vm42, %v32, 0
    %v89 = vsel %vm42, %v33, 0
    %vm91 = vcmask 1042432
    %v93 = vsel %vm91, %v34, 0
    %95 = vmatprep.subr.mxu0 0.0
    %96 = vmatpush1.msra.mxu0 0.0
    %97 = vmatprep.subr.mxu0 0.0
    %98 = vmatpush1.msra.mxu0 0.0
    %99 = vmatprep.subr.mxu0 0.0
    %100 = vmatpush1.msra.mxu0 0.0
    %101 = vmatprep.subr.mxu0 0.0
    %102 = vmatpush1.msra.mxu0 0.0
    %103 = vmatprep.subr.mxu0 0.0
    %104 = vmatpush1.msra.mxu0 0.0
    %105 = vmatprep.subr.mxu0 0.0
    %106 = vmatpush1.msra.mxu0 0.0
    %107 = vmatprep.subr.mxu0 0.0
    %108 = vmatpush1.msra.mxu0 0.0
    %109 = vmatprep.subr.mxu0 0.0
    %110 = vmatpush1.msra.mxu0 0.0
    %111 = vmatprep.subr.mxu0 0.0
    %112 = vmatpush1.msra.mxu0 0.0
    %113 = vmatprep.subr.mxu0 0.0
    %114 = vmatpush1.msra.mxu0 0.0
    %115 = vmatprep.subr.mxu0 0.0
    %116 = vmatpush1.msra.mxu0 0.0
    %117 = vmatprep.subr.mxu0 0.0
    %118 = vmatpush1.msra.mxu0 0.0
    %119 = vmatprep.subr.mxu0 0.0
    %120 = vmatpush1.msra.mxu0 0.0
    %121 = vmatprep.subr.mxu0 0.0
    %122 = vmatpush1.msra.mxu0 0.0
    %123 = vmatprep.subr.mxu0 0.0
    %124 = vmatpush1.msra.mxu0 0.0
    %125 = vmatprep.subr.mxu0 0.0
    %126 = vmatpush1.msra.mxu0 %v93
    %127 = vmatprep.subr.mxu0 0.0
    %128 = vmatpush2.msra.mxu0 0.0
    %129 = vmatprep.subr.mxu0 0.0
    %130 = vmatpush2.msra.mxu0 0.0
    %131 = vmatprep.subr.mxu0 0.0
    %132 = vmatpush2.msra.mxu0 0.0
    %133 = vmatprep.subr.mxu0 0.0
    %134 = vmatpush2.msra.mxu0 0.0
    %135 = vmatprep.subr.mxu0 0.0
    %136 = vmatpush2.msra.mxu0 0.0
    %137 = vmatprep.subr.mxu0 0.0
    %138 = vmatpush2.msra.mxu0 0.0
    %139 = vmatprep.subr.mxu0 0.0
    %140 = vmatpush2.msra.mxu0 0.0
    %141 = vmatprep.subr.mxu0 0.0
    %142 = vmatpush2.msra.mxu0 0.0
    %143 = vmatprep.subr.mxu0 0.0
    %144 = vmatpush2.msra.mxu0 0.0
    %145 = vmatprep.subr.mxu0 0.0
    %146 = vmatpush2.msra.mxu0 0.0
    %147 = vmatprep.subr.mxu0 0.0
    %148 = vmatpush2.msra.mxu0 0.0
    %149 = vmatprep.subr.mxu0 0.0
    %150 = vmatpush2.msra.mxu0 0.0
    %151 = vmatprep.subr.mxu0 0.0
    %152 = vmatpush2.msra.mxu0 0.0
    %153 = vmatprep.subr.mxu0 0.0
    %154 = vmatpush2.msra.mxu0 0.0
    %155 = vmatprep.subr.mxu0 0.0
    %156 = vmatpush2.msra.mxu0 0.0
    %157 = vmatprep.subr.mxu0 0.0
    %158 = vmatpush2.msra.mxu0 0.0
    %159 = vmatprep.mubr.f32.mxu0 0.0
    %160 = vmatmul.mubr.f32.gmra.mxu0 %v44
    %v161 = vpop.f32.mrf.mxu0
    %v162 = vadd.f32 %v40, %v161
    %v163 = vpop.f32.mrf.mxu0
    %164 = vmatprep.mubr.f32.mxu0 0.0
    %165 = vmatmul.mubr.f32.gmra.mxu0 %v47
    %v166 = vpop.f32.mrf.mxu0
    %v167 = vadd.f32 %v40, %v166
    %v168 = vpop.f32.mrf.mxu0
    %169 = vmatprep.mubr.f32.mxu0 0.0
    %170 = vmatmul.mubr.f32.gmra.mxu0 %v50
    %v171 = vpop.f32.mrf.mxu0
    %v172 = vadd.f32 %v40, %v171
    %v173 = vpop.f32.mrf.mxu0
    %174 = vmatprep.mubr.f32.mxu0 0.0
    %175 = vmatmul.mubr.f32.gmra.mxu0 %v53
    %v176 = vpop.f32.mrf.mxu0
    %v177 = vadd.f32 %v40, %v176
    %v178 = vpop.f32.mrf.mxu0
    %179 = vmatprep.mubr.f32.mxu0 0.0
    %180 = vmatmul.mubr.f32.gmra.mxu0 %v56
    %v181 = vpop.f32.mrf.mxu0
    %v182 = vadd.f32 %v40, %v181
    %v183 = vpop.f32.mrf.mxu0
    %184 = vmatprep.mubr.f32.mxu0 0.0
    %185 = vmatmul.mubr.f32.gmra.mxu0 %v59
    %v186 = vpop.f32.mrf.mxu0
    %v187 = vadd.f32 %v40, %v186
    %v188 = vpop.f32.mrf.mxu0
    %189 = vmatprep.mubr.f32.mxu0 0.0
    %190 = vmatmul.mubr.f32.gmra.mxu0 %v62
    %v191 = vpop.f32.mrf.mxu0
    %v192 = vadd.f32 %v40, %v191
    %v193 = vpop.f32.mrf.mxu0
    %194 = vmatprep.mubr.f32.mxu0 0.0
    %195 = vmatmul.mubr.f32.gmra.mxu0 %v65
    %v196 = vpop.f32.mrf.mxu0
    %v197 = vadd.f32 %v40, %v196
    %v198 = vpop.f32.mrf.mxu0
    %199 = vmatprep.mubr.f32.mxu0 0.0
    %200 = vmatmul.mubr.f32.gmra.mxu0 %v68
    %v201 = vpop.f32.mrf.mxu0
    %v202 = vadd.f32 %v40, %v201
    %v203 = vpop.f32.mrf.mxu0
    %204 = vmatprep.mubr.f32.mxu0 0.0
    %205 = vmatmul.mubr.f32.gmra.mxu0 %v71
    %v206 = vpop.f32.mrf.mxu0
    %v207 = vadd.f32 %v40, %v206
    %v208 = vpop.f32.mrf.mxu0
    %209 = vmatprep.mubr.f32.mxu0 0.0
    %210 = vmatmul.mubr.f32.gmra.mxu0 %v74
    %v211 = vpop.f32.mrf.mxu0
    %v212 = vadd.f32 %v40, %v211
    %v213 = vpop.f32.mrf.mxu0
    %214 = vmatprep.mubr.f32.mxu0 0.0
    %215 = vmatmul.mubr.f32.gmra.mxu0 %v77
    %v216 = vpop.f32.mrf.mxu0
    %v217 = vadd.f32 %v40, %v216
    %v218 = vpop.f32.mrf.mxu0
    %219 = vmatprep.mubr.f32.mxu0 0.0
    %220 = vmatmul.mubr.f32.gmra.mxu0 %v80
    %v221 = vpop.f32.mrf.mxu0
    %v222 = vadd.f32 %v40, %v221
    %v223 = vpop.f32.mrf.mxu0
    %224 = vmatprep.mubr.f32.mxu0 0.0
    %225 = vmatmul.mubr.f32.gmra.mxu0 %v83
    %v226 = vpop.f32.mrf.mxu0
    %v227 = vadd.f32 %v40, %v226
    %v228 = vpop.f32.mrf.mxu0
    %229 = vmatprep.mubr.f32.mxu0 0.0
    %230 = vmatmul.mubr.f32.gmra.mxu0 %v86
    %v231 = vpop.f32.mrf.mxu0
    %v232 = vadd.f32 %v40, %v231
    %v233 = vpop.f32.mrf.mxu0
    %234 = vmatprep.mubr.f32.mxu0 0.0
    %235 = vmatmul.mubr.f32.gmra.mxu0 %v89
    %v236 = vpop.f32.mrf.mxu0
    %v237 = vadd.f32 %v40, %v236
    %v238 = vpop.f32.mrf.mxu0
    %239 = vdwg.mxu0
    %v240 = vld [vmem:[%s3] sm:$0xff]
    %v241 = vld [vmem:[%s3 + $0x8] sm:$0xff]
    %v242 = vld [vmem:[%s3 + $0x10] sm:$0xff]
    %v243 = vld [vmem:[%s3 + $0x18] sm:$0xff]
    %v244 = vld [vmem:[%s3 + $0x20] sm:$0xff]
    %v245 = vld [vmem:[%s3 + $0x28] sm:$0xff]
    %v246 = vld [vmem:[%s3 + $0x30] sm:$0xff]
    %v247 = vld [vmem:[%s3 + $0x38] sm:$0xff]
    %v248 = vld [vmem:[%s3 + $0x40] sm:$0xff]
    %v249 = vld [vmem:[%s3 + $0x48] sm:$0xff]
    %v250 = vld [vmem:[%s3 + $0x50] sm:$0xff]
    %v251 = vld [vmem:[%s3 + $0x58] sm:$0xff]
    %v252 = vld [vmem:[%s3 + $0x60] sm:$0xff]
    %v253 = vld [vmem:[%s3 + $0x68] sm:$0xff]
    %v254 = vld [vmem:[%s3 + $0x70] sm:$0xff]
    %v255 = vld [vmem:[%s3 + $0x78] sm:$0xff]
    %256 = vmatprep.subr.mxu0 0.0
    %257 = vmatpush1.msra.mxu0 %v255
    %258 = vmatprep.subr.mxu0 0.0
    %259 = vmatpush1.msra.mxu0 %v254
    %260 = vmatprep.subr.mxu0 0.0
    %261 = vmatpush1.msra.mxu0 %v253
    %262 = vmatprep.subr.mxu0 0.0
    %263 = vmatpush1.msra.mxu0 %v252
    %264 = vmatprep.subr.mxu0 0.0
    %265 = vmatpush1.msra.mxu0 %v251
    %266 = vmatprep.subr.mxu0 0.0
    %267 = vmatpush1.msra.mxu0 %v250
    %268 = vmatprep.subr.mxu0 0.0
    %269 = vmatpush1.msra.mxu0 %v249
    %270 = vmatprep.subr.mxu0 0.0
    %271 = vmatpush1.msra.mxu0 %v248
    %272 = vmatprep.subr.mxu0 0.0
    %273 = vmatpush1.msra.mxu0 %v247
    %274 = vmatprep.subr.mxu0 0.0
    %275 = vmatpush1.msra.mxu0 %v246
    %276 = vmatprep.subr.mxu0 0.0
    %277 = vmatpush1.msra.mxu0 %v245
    %278 = vmatprep.subr.mxu0 0.0
    %279 = vmatpush1.msra.mxu0 %v244
    %280 = vmatprep.subr.mxu0 0.0
    %281 = vmatpush1.msra.mxu0 %v243
    %282 = vmatprep.subr.mxu0 0.0
    %283 = vmatpush1.msra.mxu0 %v242
    %284 = vmatprep.subr.mxu0 0.0
    %285 = vmatpush1.msra.mxu0 %v241
    %286 = vmatprep.subr.mxu0 0.0
    %287 = vmatpush1.msra.mxu0 %v240
    %288 = vmatprep.subr.mxu0 0.0
    %289 = vmatpush2.msra.mxu0 0.0
    %290 = vmatprep.subr.mxu0 0.0
    %291 = vmatpush2.msra.mxu0 0.0
    %292 = vmatprep.subr.mxu0 0.0
    %293 = vmatpush2.msra.mxu0 0.0
    %294 = vmatprep.subr.mxu0 0.0
    %295 = vmatpush2.msra.mxu0 0.0
    %296 = vmatprep.subr.mxu0 0.0
    %297 = vmatpush2.msra.mxu0 0.0
    %298 = vmatprep.subr.mxu0 0.0
    %299 = vmatpush2.msra.mxu0 0.0
    %300 = vmatprep.subr.mxu0 0.0
    %301 = vmatpush2.msra.mxu0 0.0
    %302 = vmatprep.subr.mxu0 0.0
    %303 = vmatpush2.msra.mxu0 0.0
    %304 = vmatprep.subr.mxu0 0.0
    %305 = vmatpush2.msra.mxu0 0.0
    %306 = vmatprep.subr.mxu0 0.0
    %307 = vmatpush2.msra.mxu0 0.0
    %308 = vmatprep.subr.mxu0 0.0
    %309 = vmatpush2.msra.mxu0 0.0
    %310 = vmatprep.subr.mxu0 0.0
    %311 = vmatpush2.msra.mxu0 0.0
    %312 = vmatprep.subr.mxu0 0.0
    %313 = vmatpush2.msra.mxu0 0.0
    %314 = vmatprep.subr.mxu0 0.0
    %315 = vmatpush2.msra.mxu0 0.0
    %316 = vmatprep.subr.mxu0 0.0
    %317 = vmatpush2.msra.mxu0 0.0
    %318 = vmatprep.subr.mxu0 0.0
    %319 = vmatpush2.msra.mxu0 0.0
    %320 = vmatprep.mubr.f32.mxu0 0.0
    %321 = vmatmul.mubr.f32.gmra.mxu0 %v162
    %v322 = vpop.f32.mrf.mxu0
    %v323 = vadd.f32 0.0, %v322
    %v324 = vpop.f32.mrf.mxu0
    %325 = vmatprep.mubr.f32.mxu0 0.0
    %326 = vmatmul.mubr.f32.gmra.mxu0 %v167
    %v327 = vpop.f32.mrf.mxu0
    %v328 = vadd.f32 0.0, %v327
    %v329 = vpop.f32.mrf.mxu0
    %330 = vmatprep.mubr.f32.mxu0 0.0
    %331 = vmatmul.mubr.f32.gmra.mxu0 %v172
    %v332 = vpop.f32.mrf.mxu0
    %v333 = vadd.f32 0.0, %v332
    %v334 = vpop.f32.mrf.mxu0
    %335 = vmatprep.mubr.f32.mxu0 0.0
    %336 = vmatmul.mubr.f32.gmra.mxu0 %v177
    %v337 = vpop.f32.mrf.mxu0
    %v338 = vadd.f32 0.0, %v337
    %v339 = vpop.f32.mrf.mxu0
    %340 = vmatprep.mubr.f32.mxu0 0.0
    %341 = vmatmul.mubr.f32.gmra.mxu0 %v182
    %v342 = vpop.f32.mrf.mxu0
    %v343 = vadd.f32 0.0, %v342
    %v344 = vpop.f32.mrf.mxu0
    %345 = vmatprep.mubr.f32.mxu0 0.0
    %346 = vmatmul.mubr.f32.gmra.mxu0 %v187
    %v347 = vpop.f32.mrf.mxu0
    %v348 = vadd.f32 0.0, %v347
    %v349 = vpop.f32.mrf.mxu0
    %350 = vmatprep.mubr.f32.mxu0 0.0
    %351 = vmatmul.mubr.f32.gmra.mxu0 %v192
    %v352 = vpop.f32.mrf.mxu0
    %v353 = vadd.f32 0.0, %v352
    %v354 = vpop.f32.mrf.mxu0
    %355 = vmatprep.mubr.f32.mxu0 0.0
    %356 = vmatmul.mubr.f32.gmra.mxu0 %v197
    %v357 = vpop.f32.mrf.mxu0
    %v358 = vadd.f32 0.0, %v357
    %v359 = vpop.f32.mrf.mxu0
    %360 = vmatprep.mubr.f32.mxu0 0.0
    %361 = vmatmul.mubr.f32.gmra.mxu0 %v202
    %v362 = vpop.f32.mrf.mxu0
    %v363 = vadd.f32 0.0, %v362
    %v364 = vpop.f32.mrf.mxu0
    %365 = vmatprep.mubr.f32.mxu0 0.0
    %366 = vmatmul.mubr.f32.gmra.mxu0 %v207
    %v367 = vpop.f32.mrf.mxu0
    %v368 = vadd.f32 0.0, %v367
    %v369 = vpop.f32.mrf.mxu0
    %370 = vmatprep.mubr.f32.mxu0 0.0
    %371 = vmatmul.mubr.f32.gmra.mxu0 %v212
    %v372 = vpop.f32.mrf.mxu0
    %v373 = vadd.f32 0.0, %v372
    %v374 = vpop.f32.mrf.mxu0
    %375 = vmatprep.mubr.f32.mxu0 0.0
    %376 = vmatmul.mubr.f32.gmra.mxu0 %v217
    %v377 = vpop.f32.mrf.mxu0
    %v378 = vadd.f32 0.0, %v377
    %v379 = vpop.f32.mrf.mxu0
    %380 = vmatprep.mubr.f32.mxu0 0.0
    %381 = vmatmul.mubr.f32.gmra.mxu0 %v222
    %v382 = vpop.f32.mrf.mxu0
    %v383 = vadd.f32 0.0, %v382
    %v384 = vpop.f32.mrf.mxu0
    %385 = vmatprep.mubr.f32.mxu0 0.0
    %386 = vmatmul.mubr.f32.gmra.mxu0 %v227
    %v387 = vpop.f32.mrf.mxu0
    %v388 = vadd.f32 0.0, %v387
    %v389 = vpop.f32.mrf.mxu0
    %390 = vmatprep.mubr.f32.mxu0 0.0
    %391 = vmatmul.mubr.f32.gmra.mxu0 %v232
    %v392 = vpop.f32.mrf.mxu0
    %v393 = vadd.f32 0.0, %v392
    %v394 = vpop.f32.mrf.mxu0
    %395 = vmatprep.mubr.f32.mxu0 0.0
    %396 = vmatmul.mubr.f32.gmra.mxu0 %v237
    %v397 = vpop.f32.mrf.mxu0
    %v398 = vadd.f32 0.0, %v397
    %v399 = vpop.f32.mrf.mxu0
    %400 = vdwg.mxu0
    %v401 = vpack.c.bf16 %v328, %v323
    %v402 = vpack.c.bf16 %v338, %v333
    %v403 = vpack.c.bf16 %v348, %v343
    %v404 = vpack.c.bf16 %v358, %v353
    %v405 = vpack.c.bf16 %v368, %v363
    %v406 = vpack.c.bf16 %v378, %v373
    %v407 = vpack.c.bf16 %v388, %v383
    %v408 = vpack.c.bf16 %v398, %v393
    %v417 = vunpack.c.l.b16 %v401
    %v418 = vunpack.c.h.b16 %v401
    %v419 = vunpack.c.l.b16 %v402
    %v420 = vunpack.c.h.b16 %v402
    %v421 = vunpack.c.l.b16 %v403
    %v422 = vunpack.c.h.b16 %v403
    %v423 = vunpack.c.l.b16 %v404
    %v424 = vunpack.c.h.b16 %v404
    %v425 = vunpack.c.l.b16 %v405
    %v426 = vunpack.c.h.b16 %v405
    %v427 = vunpack.c.l.b16 %v406
    %v428 = vunpack.c.h.b16 %v406
    %v429 = vunpack.c.l.b16 %v407
    %v430 = vunpack.c.h.b16 %v407
    %v431 = vunpack.c.l.b16 %v408
    %v432 = vunpack.c.h.b16 %v408
    %v433 = vpack.c.b16 %v417, %v417
    %v434 = vpack.c.b16 %v418, %v418
    %v435 = vpack.c.b16 %v419, %v419
    %v436 = vpack.c.b16 %v420, %v420
    %v437 = vpack.c.b16 %v421, %v421
    %v438 = vpack.c.b16 %v422, %v422
    %v439 = vpack.c.b16 %v423, %v423
    %v440 = vpack.c.b16 %v424, %v424
    %v441 = vpack.c.b16 %v425, %v425
    %v442 = vpack.c.b16 %v426, %v426
    %v443 = vpack.c.b16 %v427, %v427
    %v444 = vpack.c.b16 %v428, %v428
    %v445 = vpack.c.b16 %v429, %v429
    %v446 = vpack.c.b16 %v430, %v430
    %v447 = vpack.c.b16 %v431, %v431
    %v448 = vpack.c.b16 %v432, %v432
    %465 = vst [vmem:[#allocation2] sm:$0xf] %v433
    %466 = vst [vmem:[#allocation2 + $0x4] sm:$0xf] %v434
    %467 = vst [vmem:[#allocation2 + $0x8] sm:$0xf] %v435
    %468 = vst [vmem:[#allocation2 + $0xc] sm:$0xf] %v436
    %469 = vst [vmem:[#allocation2 + $0x10] sm:$0xf] %v437
    %470 = vst [vmem:[#allocation2 + $0x14] sm:$0xf] %v438
    %471 = vst [vmem:[#allocation2 + $0x18] sm:$0xf] %v439
    %472 = vst [vmem:[#allocation2 + $0x1c] sm:$0xf] %v440
    %473 = vst [vmem:[#allocation2 + $0x20] sm:$0xf] %v441
    %474 = vst [vmem:[#allocation2 + $0x24] sm:$0xf] %v442
    %475 = vst [vmem:[#allocation2 + $0x28] sm:$0xf] %v443
    %476 = vst [vmem:[#allocation2 + $0x2c] sm:$0xf] %v444
    %477 = vst [vmem:[#allocation2 + $0x30] sm:$0xf] %v445
    %478 = vst [vmem:[#allocation2 + $0x34] sm:$0xf] %v446
    %479 = vst [vmem:[#allocation2 + $0x38] sm:$0xf] %v447
    %480 = vst [vmem:[#allocation2 + $0x3c] sm:$0xf] %v448
    // Predicated region
    $region18: #{tpu_custom_call.1} parent=1 // pred_check
      _
    $region19: #{tpu_custom_call.1} parent=1 // pred_check_branch
      %482 = sbr.rel (0) target = $region21
    $region20: #{tpu_custom_call.1} parent=1 // pred_region
      %s484 = ssub.s32 1024, 1024
      %485 = vsyncadd [#allocation3], %s484
      %s486 = sshll.u32 [#allocation2], 4
      %s487 = int_to_ptr.vmem [resolvable:$true] %s486
      %492 = dma.vmem_to_hbm [thread:$0]  %s487, 1024, %s4, [#allocation3], 64, 64, 4
    $region21: #{tpu_custom_call.1} parent=1 // pred_fallthru
      _
    // Predicated region
    $region22: #{tpu_custom_call.1} parent=1 // pred_check
      _
    $region23: #{tpu_custom_call.1} parent=1 // pred_check_branch
      %494 = sbr.rel (0) target = $region25
    $region24: #{tpu_custom_call.1} parent=1 // pred_region
      %495 = dma.done [#allocation3], 1024
    $region25: #{tpu_custom_call.1} parent=1 // pred_fallthru
      _
    %496 = vsyncpa [#allocation3], 1

</llo_original>
